<compile_context>
chip_gen: v7x
topology: tpu7x:2x2x1
jax: 0.10.0
libtpu: 0.0.40
codegen_flags: <defaults>
</compile_context>

<pallas_src>
import functools
import math

import jax
import jax.numpy as jnp
from jax.experimental import pallas as pl
from jax.experimental.pallas import tpu as pltpu


def make_pe_table(d_model: int, max_len: int = 5000) -> jnp.ndarray:
    """Deterministic sin/cos positional-encoding table, shape [max_len, 1, d_model]."""
    position = jnp.arange(max_len, dtype=jnp.float32)[:, None]            # [L, 1]
    div_term = jnp.exp(
        jnp.arange(0, d_model, 2, dtype=jnp.float32) * (-math.log(10000.0) / d_model)
    )                                                                     # [D/2]
    pe = jnp.zeros((max_len, 1, d_model), dtype=jnp.float32)
    pe = pe.at[:, 0, 0::2].set(jnp.sin(position * div_term))
    pe = pe.at[:, 0, 1::2].set(jnp.cos(position * div_term))
    return pe


def _pe_add_kernel(x_ref, pe_ref, o_ref, *, batch: int):
    """Eval mode: y = x + pe (pe broadcast over batch on-chip).

    x_ref  : VMEM [tS, B*D]
    pe_ref : VMEM [tS, D]
    o_ref  : VMEM [tS, B*D]
    """
    pe_b = jnp.tile(pe_ref[...], (1, batch))              # [tS, D] -> [tS, B*D]
    o_ref[...] = (x_ref[...] + pe_b).astype(o_ref.dtype)


def _pe_add_dropout_kernel(x_ref, pe_ref, bits_ref, o_ref, *, batch: int, p: float):
    """Train mode: inverted dropout via integer threshold on uint32 bits.

    bits_ref : VMEM uint32 [tS, B*D] -- per-element random bits (unique per
               element, so no per-tile seed correlation issues).
    """
    pe_b = jnp.tile(pe_ref[...], (1, batch))
    y = x_ref[...] + pe_b
    # drop iff bits < round(p * 2^32)  =>  P(keep) = 1 - p
    thresh = jnp.uint32(min(int(round(p * (2.0 ** 32))), 2 ** 32 - 1))
    keep = bits_ref[...] >= thresh
    scale = 1.0 / (1.0 - p)
    o_ref[...] = jnp.where(keep, y * scale, jnp.zeros_like(y)).astype(o_ref.dtype)


def _seq_tile(seq_len: int, row_bytes: int, target_bytes: int = 2 * 1024 * 1024) -> int:
    """Pick a seq-tile size: ~2 MiB per x tile, multiple of 8, or the full seq."""
    t = (target_bytes // max(row_bytes, 1)) // 8 * 8
    t = max(t, 8)
    if t >= seq_len:
        return seq_len          # full extent -> no (8,128) divisibility concern
    return t


def positional_encoding_forward(
    x: jnp.ndarray,
    pe_table: jnp.ndarray,
    *,
    p: float = 0.1,
    train: bool = False,
    rng_key=None,
) -> jnp.ndarray:
    """x: [seq_len, batch, d_model]; returns same shape/dtype."""
    S, B, D = x.shape
    if S > pe_table.shape[0]:
        raise ValueError(f"seq_len {S} exceeds pe_table max_len {pe_table.shape[0]}")
    if not (0.0 <= p < 1.0):
        raise ValueError(f"dropout p must be in [0, 1), got {p}")

    BD = B * D
    x2 = x.reshape(S, BD)                                  # free (contiguous) view
    pe_slice = pe_table[:S, 0, :].astype(x.dtype)          # [S, D]

    itemsize = jnp.dtype(x.dtype).itemsize
    tS = _seq_tile(S, BD * itemsize)
    grid = (pl.cdiv(S, tS),)

    x_spec = pl.BlockSpec((tS, BD), lambda i: (i, 0))      # also used for out / bits
    pe_spec = pl.BlockSpec((tS, D), lambda i: (i, 0))
    cparams = pltpu.CompilerParams(dimension_semantics=("parallel",))
    out_shape = jax.ShapeDtypeStruct((S, BD), x.dtype)

    if train and p > 0.0:
        if rng_key is None:
            rng_key = jax.random.PRNGKey(0)
        bits = jax.random.bits(rng_key, (S, BD), dtype=jnp.uint32)
        kernel = functools.partial(_pe_add_dropout_kernel, batch=B, p=p)
        out2 = pl.pallas_call(
            kernel,
            out_shape=out_shape,
            grid=grid,
            in_specs=[x_spec, pe_spec, x_spec],
            out_specs=x_spec,
            compiler_params=cparams,
        )(x2, pe_slice, bits)
    else:
        kernel = functools.partial(_pe_add_kernel, batch=B)
        out2 = pl.pallas_call(
            kernel,
            out_shape=out_shape,
            grid=grid,
            in_specs=[x_spec, pe_spec],
            out_specs=x_spec,
            compiler_params=cparams,
        )(x2, pe_slice)

    return out2.reshape(S, B, D)


if __name__ == "__main__":
    # Small shapes consistent with the module: seq=8, batch=2, d_model=32.
    seq_len, batch, d_model = 8, 2, 32
    key = jax.random.PRNGKey(0)
    kx, kd = jax.random.split(key)
    x = jax.random.normal(kx, (seq_len, batch, d_model), dtype=jnp.float32)

    pe_table = make_pe_table(d_model, max_len=5000)

    # Eval mode (dropout = identity): exact add semantics.
    out_eval = jax.block_until_ready(
        positional_encoding_forward(x, pe_table, p=0.1, train=False))
    ref = x + pe_table[:seq_len]
    assert out_eval.shape == x.shape and out_eval.dtype == x.dtype
    assert jnp.allclose(out_eval, ref, atol=1e-6), "eval-mode mismatch"

    # Training mode: exercise the dropout path.
    # TODO(synk): PyTorch's dropout RNG stream is not reproducible bit-for-bit;
    #             we use a JAX PRNG stream with an explicit key instead.
    p = 0.1
    out_train = jax.block_until_ready(
        positional_encoding_forward(x, pe_table, p=p, train=True, rng_key=kd))
    assert out_train.shape == x.shape and out_train.dtype == x.dtype
    # Structural check: every element is either dropped (0) or scaled by 1/(1-p).
    scaled = ref * (1.0 / (1.0 - p))
    ok = jnp.all(
        (out_train == 0)
        | (jnp.abs(out_train - scaled) <= 1e-5 * (1.0 + jnp.abs(scaled)))
    )
    assert bool(ok), "train-mode dropout structure mismatch"

    print("KERNEL_OK")
</pallas_src>

<mosaic_0001>
module attributes {stable_mosaic.version = 11 : i64} {
  func.func @_pe_add_kernel(%arg0: i32, %arg1: memref<8x64xf32, #tpu.memory_space<vmem>>, %arg2: memref<8x32xf32, #tpu.memory_space<vmem>>, %arg3: memref<8x64xf32, #tpu.memory_space<vmem>>) attributes {dimension_semantics = [#tpu.dimension_semantics<parallel>], iteration_bounds = array<i64: 1>, scalar_prefetch = 0 : i64, scratch_operands = 0 : i64, tpu.core_type = #tpu.core_type<tc>, window_params = [{transform_indices = @transform_0, window_bounds = array<i64: 8, 64>}, {transform_indices = @transform_1, window_bounds = array<i64: 8, 32>}, {transform_indices = @transform_2, window_bounds = array<i64: 8, 64>}]} {
    %c0 = arith.constant 0 : index
    %c0_0 = arith.constant 0 : index
    %0 = vector.load %arg2[%c0, %c0_0] : memref<8x32xf32, #tpu.memory_space<vmem>>, vector<8x32xf32>
    %1 = tpu.concatenate %0, %0 in 1 : vector<8x32xf32>, vector<8x32xf32> -> vector<8x64xf32>
    %c0_1 = arith.constant 0 : index
    %c0_2 = arith.constant 0 : index
    %2 = vector.load %arg1[%c0_1, %c0_2] : memref<8x64xf32, #tpu.memory_space<vmem>>, vector<8x64xf32>
    %3 = arith.addf %2, %1 : vector<8x64xf32>
    %c0_3 = arith.constant 0 : index
    %c0_4 = arith.constant 0 : index
    %4 = vector.load %arg3[%c0_3, %c0_4] : memref<8x64xf32, #tpu.memory_space<vmem>>, vector<8x64xf32>
    tpu.vector_store %arg3[%c0_3, %c0_4], %3 {strides = array<i32>} : memref<8x64xf32, #tpu.memory_space<vmem>>, vector<8x64xf32>,
    return
  }
  func.func @transform_0(%arg0: i32) -> (i32, i32) {
    %c0_i32 = arith.constant 0 : i32
    %c0_i32_0 = arith.constant 0 : i32
    return %arg0, %c0_i32 : i32, i32
  }
  func.func @transform_1(%arg0: i32) -> (i32, i32) {
    %c0_i32 = arith.constant 0 : i32
    %c0_i32_0 = arith.constant 0 : i32
    return %arg0, %c0_i32 : i32, i32
  }
  func.func @transform_2(%arg0: i32) -> (i32, i32) {
    %c0_i32 = arith.constant 0 : i32
    %c0_i32_0 = arith.constant 0 : i32
    return %arg0, %c0_i32 : i32, i32
  }
}

</mosaic_0001>

<llo_original>
// kernel: tpu_custom_call.1
$region0: #{tpu_custom_call.1}
  #allocation0 [shape = 'u32[]', space=smem, size = 0x4, offset = 0x4, fixed_abs, tag = 'smem constant byte address 0x4 - core index']
  #allocation1 [shape = 'u32[144,128]{1,0:T(1,128)}', space=vmem, size = 0x12000, scoped, tag = 'internal scratch']
  %s0 = inlined_call_operand.hbm [shape: f32[8,64], index: 0, kind: input, shape index: {}]
  %s1 = inlined_call_operand.hbm [shape: f32[8,32], index: 1, kind: input, shape index: {}]
  %s2 = inlined_call_operand.hbm [shape: f32[8,64], index: 2, kind: output, shape index: {}]
  %s3 = sld [smem:[#allocation0]]
  $region26: #{tpu_custom_call.1} parent=0
    _
  %s5 = ssub.s32 1, %s3
  %s6 = scalar_select 0, %s5, %s3
  $region1: #{tpu_custom_call.1} parent=0
    #allocation2 [shape = 'u8[4096]{0}', space=vmem, size = 0x1000, scoped, tag = 'input window, operand 0, single buffered']
    #allocation3 [shape = 's32[1]{0}', space=sflag, size = 0x4, scoped, tag = 'scoped memory for tpu_custom_call.1']
    #allocation4 [shape = 's32[1]{0}', space=sflag, size = 0x4, scoped, tag = 'scoped memory for tpu_custom_call.1']
    #allocation5 [shape = 'u8[4096]{0}', space=vmem, size = 0x1000, scoped, tag = 'input window, operand 1, single buffered']
    #allocation6 [shape = 's32[1]{0}', space=sflag, size = 0x4, scoped, tag = 'scoped memory for tpu_custom_call.1']
    #allocation7 [shape = 'u8[4096]{0}', space=vmem, size = 0x1000, scoped, tag = 'output window, operand 0, single buffered']
    %7 = vsyncpa [#allocation3], 0
    %8 = vsyncpa [#allocation6], 0
    %9 = vsyncpa [#allocation4], 0
    // Predicated region
    $region2: #{tpu_custom_call.1} parent=1 // pred_check
      _
    $region3: #{tpu_custom_call.1} parent=1 // pred_check_branch
      %11 = sbr.rel (0) target = $region5
    $region4: #{tpu_custom_call.1} parent=1 // pred_region
      %s13 = ssub.s32 128, 128
      %14 = vsyncadd [#allocation3], %s13
      %s16 = sshll.u32 [#allocation2], 4
      %s17 = int_to_ptr.vmem [resolvable:$true] %s16
      %19 = dma.hbm_to_vmem [thread:$0]  %s0, 128, %s17, [#allocation3]
    $region5: #{tpu_custom_call.1} parent=1 // pred_fallthru
      _
    // Predicated region
    $region6: #{tpu_custom_call.1} parent=1 // pred_check
      _
    $region7: #{tpu_custom_call.1} parent=1 // pred_check_branch
      %21 = sbr.rel (0) target = $region9
    $region8: #{tpu_custom_call.1} parent=1 // pred_region
      %s23 = ssub.s32 128, 128
      %24 = vsyncadd [#allocation6], %s23
      %s26 = sshll.u32 [#allocation5], 4
      %s27 = int_to_ptr.vmem [resolvable:$true] %s26
      %29 = dma.hbm_to_vmem [thread:$0]  %s1, 128, %s27, [#allocation6]
    $region9: #{tpu_custom_call.1} parent=1 // pred_fallthru
      _
    // Predicated region
    $region10: #{tpu_custom_call.1} parent=1 // pred_check
      _
    $region11: #{tpu_custom_call.1} parent=1 // pred_check_branch
      %31 = sbr.rel (0) target = $region13
    $region12: #{tpu_custom_call.1} parent=1 // pred_region
      %32 = dma.done [#allocation3], 128
    $region13: #{tpu_custom_call.1} parent=1 // pred_fallthru
      _
    // Predicated region
    $region14: #{tpu_custom_call.1} parent=1 // pred_check
      _
    $region15: #{tpu_custom_call.1} parent=1 // pred_check_branch
      %34 = sbr.rel (0) target = $region17
    $region16: #{tpu_custom_call.1} parent=1 // pred_region
      %35 = dma.done [#allocation6], 128
    $region17: #{tpu_custom_call.1} parent=1 // pred_fallthru
      _
    %v36 = vld [vmem:[#allocation5] sm:$0xff]
    %38 = vrot.lane.b32.xlu0 %v36, 32
    %v39 = vpop.permute.xlu0 %38
    %vm41 = vcmask 261120
    %v42 = vsel %vm41, %v36, %v39
    %v43 = vld [vmem:[#allocation2] sm:$0xff]
    %v44 = vadd.f32 %v43, %v42
    %vm45 = vcmask 523264
    %46 = vst.msk [vmem:[#allocation7] sm:$0xff] %vm45, %v44
    // Predicated region
    $region18: #{tpu_custom_call.1} parent=1 // pred_check
      _
    $region19: #{tpu_custom_call.1} parent=1 // pred_check_branch
      %48 = sbr.rel (0) target = $region21
    $region20: #{tpu_custom_call.1} parent=1 // pred_region
      %s50 = ssub.s32 128, 128
      %51 = vsyncadd [#allocation4], %s50
      %s53 = sshll.u32 [#allocation7], 4
      %s54 = int_to_ptr.vmem [resolvable:$true] %s53
      %56 = dma.vmem_to_hbm [thread:$0]  %s54, 128, %s2, [#allocation4]
    $region21: #{tpu_custom_call.1} parent=1 // pred_fallthru
      _
    // Predicated region
    $region22: #{tpu_custom_call.1} parent=1 // pred_check
      _
    $region23: #{tpu_custom_call.1} parent=1 // pred_check_branch
      %58 = sbr.rel (0) target = $region25
    $region24: #{tpu_custom_call.1} parent=1 // pred_region
      %59 = dma.done [#allocation4], 128
    $region25: #{tpu_custom_call.1} parent=1 // pred_fallthru
      _
    %60 = vsyncpa [#allocation3], 1
    %61 = vsyncpa [#allocation6], 1
    %62 = vsyncpa [#allocation4], 1

</llo_original>
